<compile_context>
chip_gen: v7x
topology: tpu7x:2x2x1
jax: 0.10.0
libtpu: 0.0.40
codegen_flags: <defaults>
</compile_context>

<pallas_src>
import functools

import jax
import jax.numpy as jnp
from jax.experimental import pallas as pl
from jax.experimental.pallas import tpu as pltpu

FEATURE_DIM = 32
ACTION_DIM = 8
H1, H2, H3 = 180, 151, 127

# Lane-friendly padded hidden/output widths (multiples of 128).
H1_PAD, H2_PAD, H3_PAD, A_PAD = 256, 256, 128, 128

BATCH_TILE = 1024                       # rows per grid step (sweep 1024-2048)
VMEM_LIMIT_BYTES = 40 * 1024 * 1024     # headroom over default scoped limit, < v7x physical


def _round_up(x, m):
    return (x + m - 1) // m * m


def _supports_bf16_tanh():
    """bf16 EUP path exists on v6e / v7x; keep tanh in f32 on v5e and older."""
    try:
        kind = jax.devices()[0].device_kind.lower()
    except Exception:
        return False
    if any(old in kind for old in ("v2", "v3", "v4", "v5")):
        return False
    return ("v6" in kind) or ("v7" in kind)


def actor_kernel(obs_ref,
                 w1_ref, b1_ref,
                 w2_ref, b2_ref,
                 w3_ref, b3_ref,
                 w4_ref, b4_ref,
                 out_ref, *, bf16_tanh):
    """Whole 4-layer MLP for one batch tile, entirely in VMEM.

    obs arrives as raw f32 (tile, F) and is cast to bf16 in-register; weights are bf16
    (MXU-native); accumulation and bias adds stay f32.  Only the first ACTION_DIM lanes
    of the final logits are stored (narrow output -> no padded HBM write-back).
    """
    def tanh_act(h):
        if bf16_tanh:                                   # v6e / v7x: bf16 EUP (~2x rate)
            return jnp.tanh(h.astype(jnp.bfloat16))
        return jnp.tanh(h).astype(jnp.bfloat16)         # v5e: transcendental in f32

    x = obs_ref[...].astype(jnp.bfloat16)               # (tile, F) bf16

    h = jnp.dot(x, w1_ref[...], preferred_element_type=jnp.float32) + b1_ref[...]
    h = jnp.maximum(h, 0.0).astype(jnp.bfloat16)        # ReLU

    h = jnp.dot(h, w2_ref[...], preferred_element_type=jnp.float32) + b2_ref[...]
    h = tanh_act(h)                                     # Tanh

    h = jnp.dot(h, w3_ref[...], preferred_element_type=jnp.float32) + b3_ref[...]
    h = tanh_act(h)                                     # Tanh

    logits = jnp.dot(h, w4_ref[...], preferred_element_type=jnp.float32) + b4_ref[...]
    out_ref[...] = logits[:, :out_ref.shape[1]].astype(out_ref.dtype)


def pad_and_cast_params(params):
    """Zero-pad layer widths to lane multiples; weights -> bf16, biases -> f32 (1, out).

    IMPORTANT: padding must stay zero (zero weights + zero biases keep padded lanes inert
    through ReLU/Tanh).  The first layer keeps its true fan-in F (no K padding).
    """
    w1, b1, w2, b2, w3, b3, w4, b4 = params

    def pad_w(w, rows, cols):
        out = jnp.zeros((rows, cols), jnp.bfloat16)
        return out.at[:w.shape[0], :w.shape[1]].set(w.astype(jnp.bfloat16))

    def pad_b(b, cols):
        b = b.reshape(1, -1)
        out = jnp.zeros((1, cols), jnp.float32)
        return out.at[:, :b.shape[1]].set(b.astype(jnp.float32))

    F = w1.shape[0]
    return (pad_w(w1, F, H1_PAD),      pad_b(b1, H1_PAD),
            pad_w(w2, H1_PAD, H2_PAD), pad_b(b2, H2_PAD),
            pad_w(w3, H2_PAD, H3_PAD), pad_b(b3, H3_PAD),
            pad_w(w4, H3_PAD, A_PAD),  pad_b(b4, A_PAD))


def _pick_tile(B, batch_tile):
    """Balanced batch split: tile as large as possible (<= batch_tile, multiple of 16)
    while keeping last-tile zero-row waste small (e.g. B=300 -> tile=304, not 256+512)."""
    n_steps = -(-B // batch_tile)                 # ceil
    tile = _round_up(-(-B // n_steps), 16)        # balanced rows per step
    return min(tile, _round_up(B, 16))


def _resident_spec(shape):
    # Full block, constant index_map -> fetched once, resident in VMEM across grid steps.
    return pl.BlockSpec(shape, lambda i: (0, 0))


def make_actor_forward(params, *, batch_tile=BATCH_TILE):
    """Pad/cast parameters ONCE and return a jitted forward(obs)->logits closure."""
    padded = pad_and_cast_params(params)
    feature_dim = params[0].shape[0]
    action_dim = params[6].shape[1]
    kernel = functools.partial(actor_kernel, bf16_tanh=_supports_bf16_tanh())

    def forward(obs):
        B, F = obs.shape
        assert F == feature_dim
        tile = _pick_tile(B, batch_tile)
        B_pad = _round_up(B, tile)
        if B_pad != B:                              # pad rows only; features stay raw f32
            obs = jnp.pad(obs, ((0, B_pad - B), (0, 0)))

        grid = (B_pad // tile,)
        w1p, b1p, w2p, b2p, w3p, b3p, w4p, b4p = padded

        out = pl.pallas_call(
            kernel,
            out_shape=jax.ShapeDtypeStruct((B_pad, action_dim), jnp.float32),
            grid_spec=pltpu.PrefetchScalarGridSpec(
                num_scalar_prefetch=0,
                grid=grid,
                in_specs=[
                    # raw f32 obs tile; last dim == full array dim (F), so it's legal
                    pl.BlockSpec((tile, F), lambda i: (i, 0)),
                    _resident_spec(w1p.shape), _resident_spec(b1p.shape),
                    _resident_spec(w2p.shape), _resident_spec(b2p.shape),
                    _resident_spec(w3p.shape), _resident_spec(b3p.shape),
                    _resident_spec(w4p.shape), _resident_spec(b4p.shape),
                ],
                # Narrow output: last dim == full array dim (ACTION_DIM) -> no padded
                # write-back and no post-kernel lane slice.
                out_specs=pl.BlockSpec((tile, action_dim), lambda i: (i, 0)),
            ),
            compiler_params=pltpu.CompilerParams(
                dimension_semantics=("parallel",),   # batch axis shards across TCs (v7x)
                vmem_limit_bytes=VMEM_LIMIT_BYTES),
        )(obs, w1p, b1p, w2p, b2p, w3p, b3p, w4p, b4p)

        return out[:B]                               # row slice only

    return jax.jit(forward)


def init_actor_params(key, feature_dim, action_dim):
    """Deterministic init mimicking PyTorch nn.Linear defaults
    (uniform(-1/sqrt(fan_in), 1/sqrt(fan_in))).  Weights stored (in, out), f32, unpadded."""
    dims = [(feature_dim, H1), (H1, H2), (H2, H3), (H3, action_dim)]
    params = []
    for fan_in, fan_out in dims:
        key, kw, kb = jax.random.split(key, 3)
        bound = 1.0 / jnp.sqrt(float(fan_in))
        w = jax.random.uniform(kw, (fan_in, fan_out), jnp.float32, -bound, bound)
        b = jax.random.uniform(kb, (1, fan_out), jnp.float32, -bound, bound)
        params += [w, b]
    return tuple(params)


def actor_reference(obs, params, *, bf16_tanh):
    """Pure-JAX reference with the SAME bf16-operand / f32-accumulate numerics as the
    kernel (zero padding does not change the math, so unpadded shapes are used here)."""
    w1, b1, w2, b2, w3, b3, w4, b4 = params
    bf = jnp.bfloat16

    def tanh_act(h):
        if bf16_tanh:
            return jnp.tanh(h.astype(bf))
        return jnp.tanh(h).astype(bf)

    x = obs.astype(bf)
    h = jnp.dot(x, w1.astype(bf), preferred_element_type=jnp.float32) + b1
    h = jnp.maximum(h, 0.0).astype(bf)
    h = jnp.dot(h, w2.astype(bf), preferred_element_type=jnp.float32) + b2
    h = tanh_act(h)
    h = jnp.dot(h, w3.astype(bf), preferred_element_type=jnp.float32) + b3
    h = tanh_act(h)
    return jnp.dot(h, w4.astype(bf), preferred_element_type=jnp.float32) + b4


if __name__ == "__main__":
    key = jax.random.PRNGKey(0)
    k_obs, k_params = jax.random.split(key)

    batch = 16
    obs = jax.random.normal(k_obs, (batch, FEATURE_DIM), jnp.float32)
    params = init_actor_params(k_params, FEATURE_DIM, ACTION_DIM)

    actor = make_actor_forward(params)
    logits = jax.block_until_ready(actor(obs))

    ref = actor_reference(obs, params, bf16_tanh=_supports_bf16_tanh())
    assert logits.shape == (batch, ACTION_DIM)
    assert jnp.allclose(logits, ref, atol=1e-2, rtol=1e-2), "mismatch vs reference"

    print("KERNEL_OK")
</pallas_src>

<mosaic_0001>
module attributes {stable_mosaic.version = 11 : i64} {
  func.func @actor_kernel(%arg0: i32, %arg1: memref<16x32xf32, #tpu.memory_space<vmem>>, %arg2: memref<32x256xbf16, #tpu.memory_space<vmem>>, %arg3: memref<1x256xf32, #tpu.memory_space<vmem>>, %arg4: memref<256x256xbf16, #tpu.memory_space<vmem>>, %arg5: memref<1x256xf32, #tpu.memory_space<vmem>>, %arg6: memref<256x128xbf16, #tpu.memory_space<vmem>>, %arg7: memref<1x128xf32, #tpu.memory_space<vmem>>, %arg8: memref<128x128xbf16, #tpu.memory_space<vmem>>, %arg9: memref<1x128xf32, #tpu.memory_space<vmem>>, %arg10: memref<16x8xf32, #tpu.memory_space<vmem>>) attributes {dimension_semantics = [#tpu.dimension_semantics<parallel>], iteration_bounds = array<i64: 1>, scalar_prefetch = 0 : i64, scratch_operands = 0 : i64, tpu.core_type = #tpu.core_type<tc>, window_params = [{transform_indices = @transform_0, window_bounds = array<i64: 16, 32>}, {pipeline_mode = #tpu.pipeline_mode<synchronous>, transform_indices = @transform_1, window_bounds = array<i64: 32, 256>}, {pipeline_mode = #tpu.pipeline_mode<synchronous>, transform_indices = @transform_2, window_bounds = array<i64: 1, 256>}, {pipeline_mode = #tpu.pipeline_mode<synchronous>, transform_indices = @transform_3, window_bounds = array<i64: 256, 256>}, {pipeline_mode = #tpu.pipeline_mode<synchronous>, transform_indices = @transform_4, window_bounds = array<i64: 1, 256>}, {pipeline_mode = #tpu.pipeline_mode<synchronous>, transform_indices = @transform_5, window_bounds = array<i64: 256, 128>}, {pipeline_mode = #tpu.pipeline_mode<synchronous>, transform_indices = @transform_6, window_bounds = array<i64: 1, 128>}, {pipeline_mode = #tpu.pipeline_mode<synchronous>, transform_indices = @transform_7, window_bounds = array<i64: 128, 128>}, {pipeline_mode = #tpu.pipeline_mode<synchronous>, transform_indices = @transform_8, window_bounds = array<i64: 1, 128>}, {transform_indices = @transform_9, window_bounds = array<i64: 16, 8>}]} {
    %c0 = arith.constant 0 : index
    %c0_0 = arith.constant 0 : index
    %0 = vector.load %arg1[%c0, %c0_0] : memref<16x32xf32, #tpu.memory_space<vmem>>, vector<16x32xf32>
    %1 = arith.truncf %0 : vector<16x32xf32> to vector<16x32xbf16>
    %c0_1 = arith.constant 0 : index
    %c0_2 = arith.constant 0 : index
    %2 = vector.load %arg2[%c0_1, %c0_2] : memref<32x256xbf16, #tpu.memory_space<vmem>>, vector<32x256xbf16>
    %cst = arith.constant dense<0.000000e+00> : vector<16x256xf32>
    %3 = tpu.matmul %1, %2, %cst {dimension_numbers = #tpu.dot_dimension_numbers<[1], [0], [0], [1], [0, 0, 1, 1], [], []>} : vector<16x32xbf16>, vector<32x256xbf16>, vector<16x256xf32> -> vector<16x256xf32>
    %c0_3 = arith.constant 0 : index
    %c0_4 = arith.constant 0 : index
    %4 = vector.load %arg3[%c0_3, %c0_4] : memref<1x256xf32, #tpu.memory_space<vmem>>, vector<1x256xf32>
    %5 = vector.broadcast %4 : vector<1x256xf32> to vector<16x256xf32>
    %6 = arith.addf %3, %5 : vector<16x256xf32>
    %cst_5 = arith.constant 0.000000e+00 : f32
    %7 = vector.broadcast %cst_5 : f32 to vector<16x256xf32>
    %8 = arith.maximumf %6, %7 : vector<16x256xf32>
    %9 = arith.truncf %8 : vector<16x256xf32> to vector<16x256xbf16>
    %c0_6 = arith.constant 0 : index
    %c0_7 = arith.constant 0 : index
    %10 = vector.load %arg4[%c0_6, %c0_7] : memref<256x256xbf16, #tpu.memory_space<vmem>>, vector<256x256xbf16>
    %cst_8 = arith.constant dense<0.000000e+00> : vector<16x256xf32>
    %11 = tpu.matmul %9, %10, %cst_8 {dimension_numbers = #tpu.dot_dimension_numbers<[1], [0], [0], [1], [0, 0, 1, 1], [], []>} : vector<16x256xbf16>, vector<256x256xbf16>, vector<16x256xf32> -> vector<16x256xf32>
    %c0_9 = arith.constant 0 : index
    %c0_10 = arith.constant 0 : index
    %12 = vector.load %arg5[%c0_9, %c0_10] : memref<1x256xf32, #tpu.memory_space<vmem>>, vector<1x256xf32>
    %13 = vector.broadcast %12 : vector<1x256xf32> to vector<16x256xf32>
    %14 = arith.addf %11, %13 : vector<16x256xf32>
    %15 = math.tanh %14 : vector<16x256xf32>
    %16 = arith.truncf %15 : vector<16x256xf32> to vector<16x256xbf16>
    %c0_11 = arith.constant 0 : index
    %c0_12 = arith.constant 0 : index
    %17 = vector.load %arg6[%c0_11, %c0_12] : memref<256x128xbf16, #tpu.memory_space<vmem>>, vector<256x128xbf16>
    %cst_13 = arith.constant dense<0.000000e+00> : vector<16x128xf32>
    %18 = tpu.matmul %16, %17, %cst_13 {dimension_numbers = #tpu.dot_dimension_numbers<[1], [0], [0], [1], [0, 0, 1, 1], [], []>} : vector<16x256xbf16>, vector<256x128xbf16>, vector<16x128xf32> -> vector<16x128xf32>
    %c0_14 = arith.constant 0 : index
    %c0_15 = arith.constant 0 : index
    %19 = vector.load %arg7[%c0_14, %c0_15] : memref<1x128xf32, #tpu.memory_space<vmem>>, vector<1x128xf32>
    %20 = vector.broadcast %19 : vector<1x128xf32> to vector<16x128xf32>
    %21 = arith.addf %18, %20 : vector<16x128xf32>
    %22 = math.tanh %21 : vector<16x128xf32>
    %23 = arith.truncf %22 : vector<16x128xf32> to vector<16x128xbf16>
    %c0_16 = arith.constant 0 : index
    %c0_17 = arith.constant 0 : index
    %24 = vector.load %arg8[%c0_16, %c0_17] : memref<128x128xbf16, #tpu.memory_space<vmem>>, vector<128x128xbf16>
    %cst_18 = arith.constant dense<0.000000e+00> : vector<16x128xf32>
    %25 = tpu.matmul %23, %24, %cst_18 {dimension_numbers = #tpu.dot_dimension_numbers<[1], [0], [0], [1], [0, 0, 1, 1], [], []>} : vector<16x128xbf16>, vector<128x128xbf16>, vector<16x128xf32> -> vector<16x128xf32>
    %c0_19 = arith.constant 0 : index
    %c0_20 = arith.constant 0 : index
    %26 = vector.load %arg9[%c0_19, %c0_20] : memref<1x128xf32, #tpu.memory_space<vmem>>, vector<1x128xf32>
    %27 = vector.broadcast %26 : vector<1x128xf32> to vector<16x128xf32>
    %28 = arith.addf %25, %27 : vector<16x128xf32>
    %29 = vector.extract_strided_slice %28 {offsets = [0, 0], sizes = [16, 8], strides = [1, 1]} : vector<16x128xf32> to vector<16x8xf32>
    %c0_21 = arith.constant 0 : index
    %c0_22 = arith.constant 0 : index
    %30 = vector.load %arg10[%c0_21, %c0_22] : memref<16x8xf32, #tpu.memory_space<vmem>>, vector<16x8xf32>
    tpu.vector_store %arg10[%c0_21, %c0_22], %29 {strides = array<i32>} : memref<16x8xf32, #tpu.memory_space<vmem>>, vector<16x8xf32>,
    return
  }
  func.func @transform_0(%arg0: i32) -> (i32, i32) {
    %c0_i32 = arith.constant 0 : i32
    %c0_i32_0 = arith.constant 0 : i32
    return %arg0, %c0_i32 : i32, i32
  }
  func.func @transform_1(%arg0: i32) -> (i32, i32) {
    %c0_i32 = arith.constant 0 : i32
    %c0_i32_0 = arith.constant 0 : i32
    %c0_i32_1 = arith.constant 0 : i32
    return %c0_i32, %c0_i32_0 : i32, i32
  }
  func.func @transform_2(%arg0: i32) -> (i32, i32) {
    %c0_i32 = arith.constant 0 : i32
    %c0_i32_0 = arith.constant 0 : i32
    %c0_i32_1 = arith.constant 0 : i32
    return %c0_i32, %c0_i32_0 : i32, i32
  }
  func.func @transform_3(%arg0: i32) -> (i32, i32) {
    %c0_i32 = arith.constant 0 : i32
    %c0_i32_0 = arith.constant 0 : i32
    %c0_i32_1 = arith.constant 0 : i32
    return %c0_i32, %c0_i32_0 : i32, i32
  }
  func.func @transform_4(%arg0: i32) -> (i32, i32) {
    %c0_i32 = arith.constant 0 : i32
    %c0_i32_0 = arith.constant 0 : i32
    %c0_i32_1 = arith.constant 0 : i32
    return %c0_i32, %c0_i32_0 : i32, i32
  }
  func.func @transform_5(%arg0: i32) -> (i32, i32) {
    %c0_i32 = arith.constant 0 : i32
    %c0_i32_0 = arith.constant 0 : i32
    %c0_i32_1 = arith.constant 0 : i32
    return %c0_i32, %c0_i32_0 : i32, i32
  }
  func.func @transform_6(%arg0: i32) -> (i32, i32) {
    %c0_i32 = arith.constant 0 : i32
    %c0_i32_0 = arith.constant 0 : i32
    %c0_i32_1 = arith.constant 0 : i32
    return %c0_i32, %c0_i32_0 : i32, i32
  }
  func.func @transform_7(%arg0: i32) -> (i32, i32) {
    %c0_i32 = arith.constant 0 : i32
    %c0_i32_0 = arith.constant 0 : i32
    %c0_i32_1 = arith.constant 0 : i32
    return %c0_i32, %c0_i32_0 : i32, i32
  }
  func.func @transform_8(%arg0: i32) -> (i32, i32) {
    %c0_i32 = arith.constant 0 : i32
    %c0_i32_0 = arith.constant 0 : i32
    %c0_i32_1 = arith.constant 0 : i32
    return %c0_i32, %c0_i32_0 : i32, i32
  }
  func.func @transform_9(%arg0: i32) -> (i32, i32) {
    %c0_i32 = arith.constant 0 : i32
    %c0_i32_0 = arith.constant 0 : i32
    return %arg0, %c0_i32 : i32, i32
  }
}

</mosaic_0001>

<llo_original>
// kernel: forward.1
$region0: #{forward.1}
  #allocation0 [shape = 'u32[]', space=smem, size = 0x4, offset = 0x4, fixed_abs, tag = 'smem constant byte address 0x4 - core index']
  #allocation1 [shape = 'u32[144,128]{1,0:T(1,128)}', space=vmem, size = 0x12000, scoped, tag = 'internal scratch']
  %s0 = inlined_call_operand.vmem [shape: f32[16,32], index: 0, kind: input, shape index: {}]
  %s1 = inlined_call_operand.vmem [shape: bf16[32,256], index: 1, kind: input, shape index: {}]
  %s2 = inlined_call_operand.vmem [shape: f32[1,256], index: 2, kind: input, shape index: {}]
  %s3 = inlined_call_operand.vmem [shape: bf16[256,256], index: 3, kind: input, shape index: {}]
  %s4 = inlined_call_operand.vmem [shape: f32[1,256], index: 4, kind: input, shape index: {}]
  %s5 = inlined_call_operand.vmem [shape: bf16[256,128], index: 5, kind: input, shape index: {}]
  %s6 = inlined_call_operand.vmem [shape: f32[1,128], index: 6, kind: input, shape index: {}]
  %s7 = inlined_call_operand.vmem [shape: bf16[128,128], index: 7, kind: input, shape index: {}]
  %s8 = inlined_call_operand.vmem [shape: f32[1,128], index: 8, kind: input, shape index: {}]
  %s9 = inlined_call_operand.vmem [shape: f32[16,8], index: 9, kind: output, shape index: {}]
  %s10 = sld [smem:[#allocation0]]
  $region46: #{forward.1} parent=0
    _
  %s12 = ssub.s32 1, %s10
  %s13 = scalar_select 0, %s12, %s10
  // Predicated region
  $region2: #{forward.1} parent=0 // pred_check
    _
  $region3: #{forward.1} parent=0 // pred_check_branch
    %15 = sbr.rel (0) target = $region5
  $region4: #{forward.1} parent=0 // pred_region
    _
  $region5: #{forward.1} parent=0 // pred_fallthru
    _
  // Predicated region
  $region6: #{forward.1} parent=0 // pred_check
    _
  $region7: #{forward.1} parent=0 // pred_check_branch
    %17 = sbr.rel (0) target = $region9
  $region8: #{forward.1} parent=0 // pred_region
    _
  $region9: #{forward.1} parent=0 // pred_fallthru
    _
  // Predicated region
  $region10: #{forward.1} parent=0 // pred_check
    _
  $region11: #{forward.1} parent=0 // pred_check_branch
    %19 = sbr.rel (0) target = $region13
  $region12: #{forward.1} parent=0 // pred_region
    _
  $region13: #{forward.1} parent=0 // pred_fallthru
    _
  // Predicated region
  $region14: #{forward.1} parent=0 // pred_check
    _
  $region15: #{forward.1} parent=0 // pred_check_branch
    %21 = sbr.rel (0) target = $region17
  $region16: #{forward.1} parent=0 // pred_region
    _
  $region17: #{forward.1} parent=0 // pred_fallthru
    _
  // Predicated region
  $region18: #{forward.1} parent=0 // pred_check
    _
  $region19: #{forward.1} parent=0 // pred_check_branch
    %23 = sbr.rel (0) target = $region21
  $region20: #{forward.1} parent=0 // pred_region
    _
  $region21: #{forward.1} parent=0 // pred_fallthru
    _
  // Predicated region
  $region22: #{forward.1} parent=0 // pred_check
    _
  $region23: #{forward.1} parent=0 // pred_check_branch
    %25 = sbr.rel (0) target = $region25
  $region24: #{forward.1} parent=0 // pred_region
    _
  $region25: #{forward.1} parent=0 // pred_fallthru
    _
  // Predicated region
  $region26: #{forward.1} parent=0 // pred_check
    _
  $region27: #{forward.1} parent=0 // pred_check_branch
    %27 = sbr.rel (0) target = $region29
  $region28: #{forward.1} parent=0 // pred_region
    _
  $region29: #{forward.1} parent=0 // pred_fallthru
    _
  // Predicated region
  $region30: #{forward.1} parent=0 // pred_check
    _
  $region31: #{forward.1} parent=0 // pred_check_branch
    %29 = sbr.rel (0) target = $region33
  $region32: #{forward.1} parent=0 // pred_region
    _
  $region33: #{forward.1} parent=0 // pred_fallthru
    _
  // Predicated region
  $region34: #{forward.1} parent=0 // pred_check
    _
  $region35: #{forward.1} parent=0 // pred_check_branch
    %31 = sbr.rel (0) target = $region37
  $region36: #{forward.1} parent=0 // pred_region
    _
  $region37: #{forward.1} parent=0 // pred_fallthru
    _
  %v33 = vld [vmem:[%s0] sm:$0xff]
  %v34 = vld [vmem:[%s0 + $0x8] sm:$0xff]
  %v35 = vpack.c.bf16 %v34, %v33
  %v36 = vld [vmem:[%s1] sm:$0xff]
  %v37 = vld [vmem:[%s1 + $0x8] sm:$0xff]
  %v38 = vld [vmem:[%s1 + $0x10] sm:$0xff]
  %v39 = vld [vmem:[%s1 + $0x18] sm:$0xff]
  %v40 = vld [vmem:[%s2] sm:$0x3]
  %v42 = vlaneseq
  %v43 = vshrl.u32 %v42, 7
  %v44 = vsub.s32 0, %v43
  %v45 = vrot.slane %v40, %v44
  %v46 = vlaneseq
  %v47 = vshrl.u32 %v46, 7
  %v48 = vsub.s32 1, %v47
  %v49 = vrot.slane %v40, %v48
  %v56 = vunpack.c.l.b16 %v36
  %v57 = vunpack.c.h.b16 %v36
  %v58 = vunpack.c.l.b16 %v37
  %v59 = vunpack.c.h.b16 %v37
  %v60 = vunpack.c.l.b16 %v38
  %v61 = vunpack.c.h.b16 %v38
  %v62 = vunpack.c.l.b16 %v39
  %v63 = vunpack.c.h.b16 %v39
  %v64 = vpack.c.b16 %v58, %v56
  %v65 = vpack.c.b16 %v59, %v57
  %v66 = vpack.c.b16 %v62, %v60
  %v67 = vpack.c.b16 %v63, %v61
  %vm72 = vcmask 261120
  %v74 = vsel %vm72, %v35, 0
  %76 = vmatprep.subr.bf16.mxu0 %v65
  %77 = vmatpush1.bf16.msra.mxu0 %v64
  %78 = vmatprep.subr.bf16.mxu0 %v67
  %79 = vmatpush1.bf16.msra.mxu0 %v66
  %80 = vmatprep.subr.bf16.mxu0 0
  %81 = vmatpush1.bf16.msra.mxu0 0
  %82 = vmatprep.subr.bf16.mxu0 0
  %83 = vmatpush1.bf16.msra.mxu0 0
  %84 = vmatprep.subr.bf16.mxu0 0
  %85 = vmatpush1.bf16.msra.mxu0 0
  %86 = vmatprep.subr.bf16.mxu0 0
  %87 = vmatpush1.bf16.msra.mxu0 0
  %88 = vmatprep.subr.bf16.mxu0 0
  %89 = vmatpush1.bf16.msra.mxu0 0
  %90 = vmatprep.subr.bf16.mxu0 0
  %91 = vmatpush1.bf16.msra.mxu0 0
  %92 = vmatprep.subr.bf16.mxu0 0
  %93 = vmatpush1.bf16.msra.mxu0 0
  %94 = vmatprep.subr.bf16.mxu0 0
  %95 = vmatpush1.bf16.msra.mxu0 0
  %96 = vmatprep.subr.bf16.mxu0 0
  %97 = vmatpush1.bf16.msra.mxu0 0
  %98 = vmatprep.subr.bf16.mxu0 0
  %99 = vmatpush1.bf16.msra.mxu0 0
  %100 = vmatprep.subr.bf16.mxu0 0
  %101 = vmatpush1.bf16.msra.mxu0 0
  %102 = vmatprep.subr.bf16.mxu0 0
  %103 = vmatpush1.bf16.msra.mxu0 0
  %104 = vmatprep.subr.bf16.mxu0 0
  %105 = vmatpush1.bf16.msra.mxu0 0
  %106 = vmatprep.subr.bf16.mxu0 0
  %107 = vmatpush1.bf16.msra.mxu0 0
  %108 = vmatprep.mubr.bf16.mxu0 0
  %109 = vmatmul.mubr.bf16.gmra.mrb[0].mxu0 %v74
  %v110 = vpop.f32.mrb[0].mxu0
  %v111 = vadd.f32 %v45, %v110
  %v112 = vpop.f32.mrb[0].mxu0
  %v113 = vadd.f32 %v49, %v112
  %v114 = vpop.f32.mrb[0].mxu0
  %v115 = vadd.f32 %v45, %v114
  %v116 = vpop.f32.mrb[0].mxu0
  %v117 = vadd.f32 %v49, %v116
  %118 = vdwg.mxu0
  %v119 = vmax.f32 %v111, 0.0
  %v120 = vmax.f32 %v113, 0.0
  %v121 = vmax.f32 %v115, 0.0
  %v122 = vmax.f32 %v117, 0.0
  %v123 = vpack.c.bf16 %v121, %v119
  %v124 = vpack.c.bf16 %v122, %v120
  %v125 = vld [vmem:[%s3] sm:$0xff]
  %v126 = vld [vmem:[%s3 + $0x8] sm:$0xff]
  %v127 = vld [vmem:[%s3 + $0x10] sm:$0xff]
  %v128 = vld [vmem:[%s3 + $0x18] sm:$0xff]
  %v129 = vld [vmem:[%s3 + $0x20] sm:$0xff]
  %v130 = vld [vmem:[%s3 + $0x28] sm:$0xff]
  %v131 = vld [vmem:[%s3 + $0x30] sm:$0xff]
  %v132 = vld [vmem:[%s3 + $0x38] sm:$0xff]
  %v133 = vld [vmem:[%s3 + $0x40] sm:$0xff]
  %v134 = vld [vmem:[%s3 + $0x48] sm:$0xff]
  %v135 = vld [vmem:[%s3 + $0x50] sm:$0xff]
  %v136 = vld [vmem:[%s3 + $0x58] sm:$0xff]
  %v137 = vld [vmem:[%s3 + $0x60] sm:$0xff]
  %v138 = vld [vmem:[%s3 + $0x68] sm:$0xff]
  %v139 = vld [vmem:[%s3 + $0x70] sm:$0xff]
  %v140 = vld [vmem:[%s3 + $0x78] sm:$0xff]
  %v141 = vld [vmem:[%s3 + $0x80] sm:$0xff]
  %v142 = vld [vmem:[%s3 + $0x88] sm:$0xff]
  %v143 = vld [vmem:[%s3 + $0x90] sm:$0xff]
  %v144 = vld [vmem:[%s3 + $0x98] sm:$0xff]
  %v145 = vld [vmem:[%s3 + $0xa0] sm:$0xff]
  %v146 = vld [vmem:[%s3 + $0xa8] sm:$0xff]
  %v147 = vld [vmem:[%s3 + $0xb0] sm:$0xff]
  %v148 = vld [vmem:[%s3 + $0xb8] sm:$0xff]
  %v149 = vld [vmem:[%s3 + $0xc0] sm:$0xff]
  %v150 = vld [vmem:[%s3 + $0xc8] sm:$0xff]
  %v151 = vld [vmem:[%s3 + $0xd0] sm:$0xff]
  %v152 = vld [vmem:[%s3 + $0xd8] sm:$0xff]
  %v153 = vld [vmem:[%s3 + $0xe0] sm:$0xff]
  %v154 = vld [vmem:[%s3 + $0xe8] sm:$0xff]
  %v155 = vld [vmem:[%s3 + $0xf0] sm:$0xff]
  %v156 = vld [vmem:[%s3 + $0xf8] sm:$0xff]
  %v157 = vld [vmem:[%s4] sm:$0x3]
  %v159 = vlaneseq
  %v160 = vshrl.u32 %v159, 7
  %v161 = vsub.s32 0, %v160
  %v162 = vrot.slane %v157, %v161
  %v163 = vlaneseq
  %v164 = vshrl.u32 %v163, 7
  %v165 = vsub.s32 1, %v164
  %v166 = vrot.slane %v157, %v165
  %v201 = vunpack.c.l.b16 %v125
  %v202 = vunpack.c.h.b16 %v125
  %v203 = vunpack.c.l.b16 %v126
  %v204 = vunpack.c.h.b16 %v126
  %v205 = vunpack.c.l.b16 %v127
  %v206 = vunpack.c.h.b16 %v127
  %v207 = vunpack.c.l.b16 %v128
  %v208 = vunpack.c.h.b16 %v128
  %v209 = vunpack.c.l.b16 %v129
  %v210 = vunpack.c.h.b16 %v129
  %v211 = vunpack.c.l.b16 %v130
  %v212 = vunpack.c.h.b16 %v130
  %v213 = vunpack.c.l.b16 %v131
  %v214 = vunpack.c.h.b16 %v131
  %v215 = vunpack.c.l.b16 %v132
  %v216 = vunpack.c.h.b16 %v132
  %v217 = vunpack.c.l.b16 %v133
  %v218 = vunpack.c.h.b16 %v133
  %v219 = vunpack.c.l.b16 %v134
  %v220 = vunpack.c.h.b16 %v134
  %v221 = vunpack.c.l.b16 %v135
  %v222 = vunpack.c.h.b16 %v135
  %v223 = vunpack.c.l.b16 %v136
  %v224 = vunpack.c.h.b16 %v136
  %v225 = vunpack.c.l.b16 %v137
  %v226 = vunpack.c.h.b16 %v137
  %v227 = vunpack.c.l.b16 %v138
  %v228 = vunpack.c.h.b16 %v138
  %v229 = vunpack.c.l.b16 %v139
  %v230 = vunpack.c.h.b16 %v139
  %v231 = vunpack.c.l.b16 %v140
  %v232 = vunpack.c.h.b16 %v140
  %v233 = vunpack.c.l.b16 %v141
  %v234 = vunpack.c.h.b16 %v141
  %v235 = vunpack.c.l.b16 %v142
  %v236 = vunpack.c.h.b16 %v142
  %v237 = vunpack.c.l.b16 %v143
  %v238 = vunpack.c.h.b16 %v143
  %v239 = vunpack.c.l.b16 %v144
  %v240 = vunpack.c.h.b16 %v144
  %v241 = vunpack.c.l.b16 %v145
  %v242 = vunpack.c.h.b16 %v145
  %v243 = vunpack.c.l.b16 %v146
  %v244 = vunpack.c.h.b16 %v146
  %v245 = vunpack.c.l.b16 %v147
  %v246 = vunpack.c.h.b16 %v147
  %v247 = vunpack.c.l.b16 %v148
  %v248 = vunpack.c.h.b16 %v148
  %v249 = vunpack.c.l.b16 %v149
  %v250 = vunpack.c.h.b16 %v149
  %v251 = vunpack.c.l.b16 %v150
  %v252 = vunpack.c.h.b16 %v150
  %v253 = vunpack.c.l.b16 %v151
  %v254 = vunpack.c.h.b16 %v151
  %v255 = vunpack.c.l.b16 %v152
  %v256 = vunpack.c.h.b16 %v152
  %v257 = vunpack.c.l.b16 %v153
  %v258 = vunpack.c.h.b16 %v153
  %v259 = vunpack.c.l.b16 %v154
  %v260 = vunpack.c.h.b16 %v154
  %v261 = vunpack.c.l.b16 %v155
  %v262 = vunpack.c.h.b16 %v155
  %v263 = vunpack.c.l.b16 %v156
  %v264 = vunpack.c.h.b16 %v156
  %v265 = vpack.c.b16 %v203, %v201
  %v266 = vpack.c.b16 %v204, %v202
  %v267 = vpack.c.b16 %v207, %v205
  %v268 = vpack.c.b16 %v208, %v206
  %v269 = vpack.c.b16 %v211, %v209
  %v270 = vpack.c.b16 %v212, %v210
  %v271 = vpack.c.b16 %v215, %v213
  %v272 = vpack.c.b16 %v216, %v214
  %v273 = vpack.c.b16 %v219, %v217
  %v274 = vpack.c.b16 %v220, %v218
  %v275 = vpack.c.b16 %v223, %v221
  %v276 = vpack.c.b16 %v224, %v222
  %v277 = vpack.c.b16 %v227, %v225
  %v278 = vpack.c.b16 %v228, %v226
  %v279 = vpack.c.b16 %v231, %v229
  %v280 = vpack.c.b16 %v232, %v230
  %v281 = vpack.c.b16 %v235, %v233
  %v282 = vpack.c.b16 %v236, %v234
  %v283 = vpack.c.b16 %v239, %v237
  %v284 = vpack.c.b16 %v240, %v238
  %v285 = vpack.c.b16 %v243, %v241
  %v286 = vpack.c.b16 %v244, %v242
  %v287 = vpack.c.b16 %v247, %v245
  %v288 = vpack.c.b16 %v248, %v246
  %v289 = vpack.c.b16 %v251, %v249
  %v290 = vpack.c.b16 %v252, %v250
  %v291 = vpack.c.b16 %v255, %v253
  %v292 = vpack.c.b16 %v256, %v254
  %v293 = vpack.c.b16 %v259, %v257
  %v294 = vpack.c.b16 %v260, %v258
  %v295 = vpack.c.b16 %v263, %v261
  %v296 = vpack.c.b16 %v264, %v262
  %329 = vmatprep.subr.bf16.mxu0 %v266
  %330 = vmatpush1.bf16.msra.mxu0 %v265
  %331 = vmatprep.subr.bf16.mxu0 %v268
  %332 = vmatpush1.bf16.msra.mxu0 %v267
  %333 = vmatprep.subr.bf16.mxu0 %v270
  %334 = vmatpush1.bf16.msra.mxu0 %v269
  %335 = vmatprep.subr.bf16.mxu0 %v272
  %336 = vmatpush1.bf16.msra.mxu0 %v271
  %337 = vmatprep.subr.bf16.mxu0 %v274
  %338 = vmatpush1.bf16.msra.mxu0 %v273
  %339 = vmatprep.subr.bf16.mxu0 %v276
  %340 = vmatpush1.bf16.msra.mxu0 %v275
  %341 = vmatprep.subr.bf16.mxu0 %v278
  %342 = vmatpush1.bf16.msra.mxu0 %v277
  %343 = vmatprep.subr.bf16.mxu0 %v280
  %344 = vmatpush1.bf16.msra.mxu0 %v279
  %345 = vmatprep.subr.bf16.mxu0 %v282
  %346 = vmatpush1.bf16.msra.mxu0 %v281
  %347 = vmatprep.subr.bf16.mxu0 %v284
  %348 = vmatpush1.bf16.msra.mxu0 %v283
  %349 = vmatprep.subr.bf16.mxu0 %v286
  %350 = vmatpush1.bf16.msra.mxu0 %v285
  %351 = vmatprep.subr.bf16.mxu0 %v288
  %352 = vmatpush1.bf16.msra.mxu0 %v287
  %353 = vmatprep.subr.bf16.mxu0 %v290
  %354 = vmatpush1.bf16.msra.mxu0 %v289
  %355 = vmatprep.subr.bf16.mxu0 %v292
  %356 = vmatpush1.bf16.msra.mxu0 %v291
  %357 = vmatprep.subr.bf16.mxu0 %v294
  %358 = vmatpush1.bf16.msra.mxu0 %v293
  %359 = vmatprep.subr.bf16.mxu0 %v296
  %360 = vmatpush1.bf16.msra.mxu0 %v295
  %361 = vmatprep.mubr.bf16.mxu0 %v124
  %362 = vmatmul.mubr.bf16.gmra.mrb[0].mxu0 %v123
  %v363 = vpop.f32.mrb[0].mxu0
  %v364 = vadd.f32 %v162, %v363
  %v365 = vpop.f32.mrb[0].mxu0
  %v366 = vadd.f32 %v166, %v365
  %v367 = vpop.f32.mrb[0].mxu0
  %v368 = vadd.f32 %v162, %v367
  %v369 = vpop.f32.mrb[0].mxu0
  %v370 = vadd.f32 %v166, %v369
  %371 = vdwg.mxu0
  %v372 = vtanh.pop %v364
  %v373 = vtanh.pop %v366
  %v374 = vtanh.pop %v368
  %v375 = vtanh.pop %v370
  %v376 = vpack.c.bf16 %v374, %v372
  %v377 = vpack.c.bf16 %v375, %v373
  %v378 = vld [vmem:[%s5] sm:$0xf]
  %v379 = vld [vmem:[%s5 + $0x4] sm:$0xf]
  %v380 = vld [vmem:[%s5 + $0x8] sm:$0xf]
  %v381 = vld [vmem:[%s5 + $0xc] sm:$0xf]
  %v382 = vld [vmem:[%s5 + $0x10] sm:$0xf]
  %v383 = vld [vmem:[%s5 + $0x14] sm:$0xf]
  %v384 = vld [vmem:[%s5 + $0x18] sm:$0xf]
  %v385 = vld [vmem:[%s5 + $0x1c] sm:$0xf]
  %v386 = vld [vmem:[%s5 + $0x20] sm:$0xf]
  %v387 = vld [vmem:[%s5 + $0x24] sm:$0xf]
  %v388 = vld [vmem:[%s5 + $0x28] sm:$0xf]
  %v389 = vld [vmem:[%s5 + $0x2c] sm:$0xf]
  %v390 = vld [vmem:[%s5 + $0x30] sm:$0xf]
  %v391 = vld [vmem:[%s5 + $0x34] sm:$0xf]
  %v392 = vld [vmem:[%s5 + $0x38] sm:$0xf]
  %v393 = vld [vmem:[%s5 + $0x3c] sm:$0xf]
  %v394 = vld [vmem:[%s5 + $0x40] sm:$0xf]
  %v395 = vld [vmem:[%s5 + $0x44] sm:$0xf]
  %v396 = vld [vmem:[%s5 + $0x48] sm:$0xf]
  %v397 = vld [vmem:[%s5 + $0x4c] sm:$0xf]
  %v398 = vld [vmem:[%s5 + $0x50] sm:$0xf]
  %v399 = vld [vmem:[%s5 + $0x54] sm:$0xf]
  %v400 = vld [vmem:[%s5 + $0x58] sm:$0xf]
  %v401 = vld [vmem:[%s5 + $0x5c] sm:$0xf]
  %v402 = vld [vmem:[%s5 + $0x60] sm:$0xf]
  %v403 = vld [vmem:[%s5 + $0x64] sm:$0xf]
  %v404 = vld [vmem:[%s5 + $0x68] sm:$0xf]
  %v405 = vld [vmem:[%s5 + $0x6c] sm:$0xf]
  %v406 = vld [vmem:[%s5 + $0x70] sm:$0xf]
  %v407 = vld [vmem:[%s5 + $0x74] sm:$0xf]
  %v408 = vld [vmem:[%s5 + $0x78] sm:$0xf]
  %v409 = vld [vmem:[%s5 + $0x7c] sm:$0xf]
  %v410 = vld [vmem:[%s6] sm:$0x1]
  %v412 = vlaneseq
  %v413 = vshrl.u32 %v412, 7
  %v414 = vsub.s32 0, %v413
  %v415 = vrot.slane %v410, %v414
  %v449 = vunpack.c.l.b16 %v378
  %v450 = vunpack.c.l.b16 %v379
  %v451 = vunpack.c.l.b16 %v380
  %v452 = vunpack.c.l.b16 %v381
  %v453 = vunpack.c.l.b16 %v382
  %v454 = vunpack.c.l.b16 %v383
  %v455 = vunpack.c.l.b16 %v384
  %v456 = vunpack.c.l.b16 %v385
  %v457 = vunpack.c.l.b16 %v386
  %v458 = vunpack.c.l.b16 %v387
  %v459 = vunpack.c.l.b16 %v388
  %v460 = vunpack.c.l.b16 %v389
  %v461 = vunpack.c.l.b16 %v390
  %v462 = vunpack.c.l.b16 %v391
  %v463 = vunpack.c.l.b16 %v392
  %v464 = vunpack.c.l.b16 %v393
  %v465 = vunpack.c.l.b16 %v394
  %v466 = vunpack.c.l.b16 %v395
  %v467 = vunpack.c.l.b16 %v396
  %v468 = vunpack.c.l.b16 %v397
  %v469 = vunpack.c.l.b16 %v398
  %v470 = vunpack.c.l.b16 %v399
  %v471 = vunpack.c.l.b16 %v400
  %v472 = vunpack.c.l.b16 %v401
  %v473 = vunpack.c.l.b16 %v402
  %v474 = vunpack.c.l.b16 %v403
  %v475 = vunpack.c.l.b16 %v404
  %v476 = vunpack.c.l.b16 %v405
  %v477 = vunpack.c.l.b16 %v406
  %v478 = vunpack.c.l.b16 %v407
  %v479 = vunpack.c.l.b16 %v408
  %v480 = vunpack.c.l.b16 %v409
  %v481 = vpack.c.b16 %v450, %v449
  %v482 = vpack.c.b16 %v452, %v451
  %v483 = vpack.c.b16 %v454, %v453
  %v484 = vpack.c.b16 %v456, %v455
  %v485 = vpack.c.b16 %v458, %v457
  %v486 = vpack.c.b16 %v460, %v459
  %v487 = vpack.c.b16 %v462, %v461
  %v488 = vpack.c.b16 %v464, %v463
  %v489 = vpack.c.b16 %v466, %v465
  %v490 = vpack.c.b16 %v468, %v467
  %v491 = vpack.c.b16 %v470, %v469
  %v492 = vpack.c.b16 %v472, %v471
  %v493 = vpack.c.b16 %v474, %v473
  %v494 = vpack.c.b16 %v476, %v475
  %v495 = vpack.c.b16 %v478, %v477
  %v496 = vpack.c.b16 %v480, %v479
  %513 = vmatprep.subr.bf16.mxu0 0
  %514 = vmatpush1.bf16.msra.mxu0 %v481
  %515 = vmatprep.subr.bf16.mxu0 0
  %516 = vmatpush1.bf16.msra.mxu0 %v482
  %517 = vmatprep.subr.bf16.mxu0 0
  %518 = vmatpush1.bf16.msra.mxu0 %v483
  %519 = vmatprep.subr.bf16.mxu0 0
  %520 = vmatpush1.bf16.msra.mxu0 %v484
  %521 = vmatprep.subr.bf16.mxu0 0
  %522 = vmatpush1.bf16.msra.mxu0 %v485
  %523 = vmatprep.subr.bf16.mxu0 0
  %524 = vmatpush1.bf16.msra.mxu0 %v486
  %525 = vmatprep.subr.bf16.mxu0 0
  %526 = vmatpush1.bf16.msra.mxu0 %v487
  %527 = vmatprep.subr.bf16.mxu0 0
  %528 = vmatpush1.bf16.msra.mxu0 %v488
  %529 = vmatprep.subr.bf16.mxu0 0
  %530 = vmatpush1.bf16.msra.mxu0 %v489
  %531 = vmatprep.subr.bf16.mxu0 0
  %532 = vmatpush1.bf16.msra.mxu0 %v490
  %533 = vmatprep.subr.bf16.mxu0 0
  %534 = vmatpush1.bf16.msra.mxu0 %v491
  %535 = vmatprep.subr.bf16.mxu0 0
  %536 = vmatpush1.bf16.msra.mxu0 %v492
  %537 = vmatprep.subr.bf16.mxu0 0
  %538 = vmatpush1.bf16.msra.mxu0 %v493
  %539 = vmatprep.subr.bf16.mxu0 0
  %540 = vmatpush1.bf16.msra.mxu0 %v494
  %541 = vmatprep.subr.bf16.mxu0 0
  %542 = vmatpush1.bf16.msra.mxu0 %v495
  %543 = vmatprep.subr.bf16.mxu0 0
  %544 = vmatpush1.bf16.msra.mxu0 %v496
  %545 = vmatprep.mubr.bf16.mxu0 %v377
  %546 = vmatmul.mubr.bf16.gmra.mrb[0].mxu0 %v376
  %v547 = vpop.f32.mrb[0].mxu0
  %v548 = vadd.f32 %v415, %v547
  %v549 = vpop.f32.mrb[0].mxu0
  %v550 = vpop.f32.mrb[0].mxu0
  %v551 = vadd.f32 %v415, %v550
  %v552 = vpop.f32.mrb[0].mxu0
  %553 = vdwg.mxu0
  %v554 = vtanh.pop %v548
  %v555 = vtanh.pop %v551
  %v556 = vpack.c.bf16 %v555, %v554
  %v557 = vld [vmem:[%s7] sm:$0xf]
  %v558 = vld [vmem:[%s7 + $0x4] sm:$0xf]
  %v559 = vld [vmem:[%s7 + $0x8] sm:$0xf]
  %v560 = vld [vmem:[%s7 + $0xc] sm:$0xf]
  %v561 = vld [vmem:[%s7 + $0x10] sm:$0xf]
  %v562 = vld [vmem:[%s7 + $0x14] sm:$0xf]
  %v563 = vld [vmem:[%s7 + $0x18] sm:$0xf]
  %v564 = vld [vmem:[%s7 + $0x1c] sm:$0xf]
  %v565 = vld [vmem:[%s7 + $0x20] sm:$0xf]
  %v566 = vld [vmem:[%s7 + $0x24] sm:$0xf]
  %v567 = vld [vmem:[%s7 + $0x28] sm:$0xf]
  %v568 = vld [vmem:[%s7 + $0x2c] sm:$0xf]
  %v569 = vld [vmem:[%s7 + $0x30] sm:$0xf]
  %v570 = vld [vmem:[%s7 + $0x34] sm:$0xf]
  %v571 = vld [vmem:[%s7 + $0x38] sm:$0xf]
  %v572 = vld [vmem:[%s7 + $0x3c] sm:$0xf]
  %v573 = vld [vmem:[%s8] sm:$0x1]
  %v575 = vlaneseq
  %v576 = vshrl.u32 %v575, 7
  %v577 = vsub.s32 0, %v576
  %v578 = vrot.slane %v573, %v577
  %v596 = vunpack.c.l.b16 %v557
  %v597 = vunpack.c.l.b16 %v558
  %v598 = vunpack.c.l.b16 %v559
  %v599 = vunpack.c.l.b16 %v560
  %v600 = vunpack.c.l.b16 %v561
  %v601 = vunpack.c.l.b16 %v562
  %v602 = vunpack.c.l.b16 %v563
  %v603 = vunpack.c.l.b16 %v564
  %v604 = vunpack.c.l.b16 %v565
  %v605 = vunpack.c.l.b16 %v566
  %v606 = vunpack.c.l.b16 %v567
  %v607 = vunpack.c.l.b16 %v568
  %v608 = vunpack.c.l.b16 %v569
  %v609 = vunpack.c.l.b16 %v570
  %v610 = vunpack.c.l.b16 %v571
  %v611 = vunpack.c.l.b16 %v572
  %v612 = vpack.c.b16 %v597, %v596
  %v613 = vpack.c.b16 %v599, %v598
  %v614 = vpack.c.b16 %v601, %v600
  %v615 = vpack.c.b16 %v603, %v602
  %v616 = vpack.c.b16 %v605, %v604
  %v617 = vpack.c.b16 %v607, %v606
  %v618 = vpack.c.b16 %v609, %v608
  %v619 = vpack.c.b16 %v611, %v610
  %628 = vmatprep.subr.bf16.mxu0 0
  %629 = vmatpush1.bf16.msra.mxu0 %v612
  %630 = vmatprep.subr.bf16.mxu0 0
  %631 = vmatpush1.bf16.msra.mxu0 %v613
  %632 = vmatprep.subr.bf16.mxu0 0
  %633 = vmatpush1.bf16.msra.mxu0 %v614
  %634 = vmatprep.subr.bf16.mxu0 0
  %635 = vmatpush1.bf16.msra.mxu0 %v615
  %636 = vmatprep.subr.bf16.mxu0 0
  %637 = vmatpush1.bf16.msra.mxu0 %v616
  %638 = vmatprep.subr.bf16.mxu0 0
  %639 = vmatpush1.bf16.msra.mxu0 %v617
  %640 = vmatprep.subr.bf16.mxu0 0
  %641 = vmatpush1.bf16.msra.mxu0 %v618
  %642 = vmatprep.subr.bf16.mxu0 0
  %643 = vmatpush1.bf16.msra.mxu0 %v619
  %644 = vmatprep.subr.bf16.mxu0 0
  %645 = vmatpush1.bf16.msra.mxu0 0
  %646 = vmatprep.subr.bf16.mxu0 0
  %647 = vmatpush1.bf16.msra.mxu0 0
  %648 = vmatprep.subr.bf16.mxu0 0
  %649 = vmatpush1.bf16.msra.mxu0 0
  %650 = vmatprep.subr.bf16.mxu0 0
  %651 = vmatpush1.bf16.msra.mxu0 0
  %652 = vmatprep.subr.bf16.mxu0 0
  %653 = vmatpush1.bf16.msra.mxu0 0
  %654 = vmatprep.subr.bf16.mxu0 0
  %655 = vmatpush1.bf16.msra.mxu0 0
  %656 = vmatprep.subr.bf16.mxu0 0
  %657 = vmatpush1.bf16.msra.mxu0 0
  %658 = vmatprep.subr.bf16.mxu0 0
  %659 = vmatpush1.bf16.msra.mxu0 0
  %660 = vmatprep.mubr.bf16.mxu0 0
  %661 = vmatmul.mubr.bf16.gmra.mrb[0].mxu0 %v556
  %v662 = vpop.f32.mrb[0].mxu0
  %v663 = vadd.f32 %v578, %v662
  %v664 = vpop.f32.mrb[0].mxu0
  %v665 = vpop.f32.mrb[0].mxu0
  %v666 = vadd.f32 %v578, %v665
  %v667 = vpop.f32.mrb[0].mxu0
  %668 = vdwg.mxu0
  %vm669 = vcmask 64512
  %670 = vst.msk [vmem:[%s9] sm:$0xff] %vm669, %v663
  %671 = vst.msk [vmem:[%s9 + $0x8] sm:$0xff] %vm669, %v666
  // Predicated region
  $region38: #{forward.1} parent=0 // pred_check
    _
  $region39: #{forward.1} parent=0 // pred_check_branch
    %673 = sbr.rel (0) target = $region41
  $region40: #{forward.1} parent=0 // pred_region
    _
  $region41: #{forward.1} parent=0 // pred_fallthru
    _
  // Predicated region
  $region42: #{forward.1} parent=0 // pred_check
    _
  $region43: #{forward.1} parent=0 // pred_check_branch
    %675 = sbr.rel (0) target = $region45
  $region44: #{forward.1} parent=0 // pred_region
    _
  $region45: #{forward.1} parent=0 // pred_fallthru
    _

</llo_original>
